<compile_context>
chip_gen: v6e
topology: v6e:2x2x1
jax: 0.10.0
libtpu: 0.0.40
codegen_flags: <defaults>
</compile_context>

<pallas_src>
import functools

import jax
import jax.numpy as jnp
from jax.experimental import pallas as pl
from jax.experimental.pallas import tpu as pltpu

MAX_LEN = 30
PAD_IDX = 0
MLP = ((MAX_LEN + 7) // 8) * 8          # table rows padded to sublane multiple (32)


def _pos_encoder_kernel(ids_ref, ent_ref, triu_ref, expand_ref, sel_ref,
                        collapse_ref, mrow_ref, wblk_ref, out_ref):
    # ids_ref:      (TB, S)           int32 entity ids, S on lanes
    # ent_ref:      (rows_blk, k*D)   entity embeds, grouped lane-dense rows
    # triu_ref:     (S, S)            upper-tri incl. diag (resident constant)
    # expand_ref:   (rows_blk, TB)    row r -> its batch b = r // G
    # sel_ref:      (rows_blk, S)     row r owns lanes s with s // k == r % G
    # collapse_ref: (S, k*MLP)        lane s feeds one-hot slot j = s % k
    # mrow_ref:     (1, k*MLP)        m index within each slot (f32)
    # wblk_ref:     (k*MLP, k*D)      k-replicated block-diagonal padded table
    # out_ref:      (rows_blk, k*D)
    f32 = jnp.float32

    # ---- masked cumulative sum over seq, in lane layout, on the MXU --------
    mask = (ids_ref[...] != PAD_IDX).astype(f32)                       # (TB, S)
    csum = jnp.dot(mask, triu_ref[...], preferred_element_type=f32)    # (TB, S)
    pos = csum * mask + float(PAD_IDX)                                  # exact ints

    # ---- redistribute positions to grouped rows + one-hot lane spread ------
    # pos_rows[r, s]      = pos[r // G, s]
    # pos_spread[r, j*MLP+m] = pos[r // G, (r % G)*k + j]
    # (two tiny matmuls + one elementwise mask; all operands are resident
    #  constants -- no per-step iota/compare rebuild, no value reshapes.)
    pos_rows = jnp.dot(expand_ref[...], pos, preferred_element_type=f32)
    pos_spread = jnp.dot(pos_rows * sel_ref[...], collapse_ref[...],
                         preferred_element_type=f32)                    # (rows_blk, k*MLP)

    # ---- embedding gather as a one-hot matmul (table never upcast) ---------
    onehot = (pos_spread == mrow_ref[...]).astype(wblk_ref.dtype)       # (rows_blk, k*MLP)
    pos_emb = jnp.dot(onehot, wblk_ref[...],
                      preferred_element_type=f32)                       # (rows_blk, k*D)

    # lane-dense add + store (k*D = 128 lanes for D=32 -> unmasked vst)
    out_ref[...] = (ent_ref[...] + pos_emb).astype(out_ref.dtype)


def _pick_block_b(B, S, D, itemsize):
    """Batch rows processed per grid step (VMEM-aware, megacore-aware)."""
    # VMEM budget for the double-buffered (in + out) embed blocks; large
    # headroom left for resident constants / temporaries and the smaller
    # per-chip scoped limits (v5e default 16 MiB scoped, v7x 64 MiB physical).
    budget = 8 << 20
    per_batch = 4 * S * D * itemsize            # 2 buffers x double-buffered
    cap = max(1, budget // per_batch)

    # Valid block sizes: B itself (single block) or a multiple-of-8 divisor of
    # B (required so partial blocks satisfy the (8, 128) sublane rule).
    cands = [tb for tb in range(8, B + 1, 8) if B % tb == 0 and tb <= cap]
    if B <= cap:
        cands.append(B)
    if not cands:  # nothing fits the budget: smallest legal block (best effort)
        divs = [tb for tb in range(8, B + 1, 8) if B % tb == 0]
        cands = [min(divs)] if divs else [B]

    # v7x has 2 TensorCores: prefer >=2 parallel grid steps once each step
    # still has enough rows to amortize the ~0.35us per-step overhead.
    multi = [tb for tb in cands if B // tb >= 2 and tb * S >= 256]
    return max(multi) if multi else max(cands)


def learned_positional_encoder(entity_embeds, entity_list, weight, *, block_b=None):
    """entity_embeds: (B, S, D); entity_list: (B, S) int; weight: (MAX_LEN, D)."""
    B, S, D = entity_embeds.shape
    assert entity_list.shape == (B, S)
    assert weight.shape == (MAX_LEN, D)
    # The torch reference would OOB-index the table if any position >= MAX_LEN;
    # we assert instead of silently clamping.
    assert S + PAD_IDX <= MAX_LEN - 1, "seq_len too large for max_len table"

    # Lane-packing factor: k consecutive seq positions per kernel row so the
    # row width k*D is lane-dense (=128) even for small D.  Falls back to k=1
    # (plain (B*S, D) rows) when D does not pack cleanly.
    if D < 128 and 128 % D == 0 and S % (128 // D) == 0:
        k = 128 // D
    else:
        k = 1
    G = S // k
    itemsize = jnp.dtype(entity_embeds.dtype).itemsize

    if block_b is None:
        block_b = _pick_block_b(B, S, D, itemsize)
    assert B % block_b == 0
    TB = block_b
    rows_blk = TB * G
    rows_total = B * G

    f32 = jnp.float32
    # ---- grid-invariant constants, built once on the wrapper side ----------
    s_i = jnp.arange(S)
    r_i = jnp.arange(rows_blk)
    c_i = jnp.arange(k * MLP)
    triu = (s_i[:, None] <= s_i[None, :]).astype(f32)                       # (S, S)
    expand = (r_i[:, None] // G == jnp.arange(TB)[None, :]).astype(f32)     # (rows_blk, TB)
    sel = (s_i[None, :] // k == (r_i[:, None] % G)).astype(f32)             # (rows_blk, S)
    collapse = ((s_i[:, None] % k) == (c_i[None, :] // MLP)).astype(f32)    # (S, k*MLP)
    mrow = (c_i % MLP).astype(f32)[None, :]                                 # (1, k*MLP)
    wpad = jnp.zeros((MLP, D), weight.dtype).at[:MAX_LEN].set(weight)       # pad 30 -> 32
    wblk = jnp.kron(jnp.eye(k, dtype=weight.dtype), wpad)                   # (k*MLP, k*D)

    ids = entity_list.astype(jnp.int32)                                     # (B, S)
    ent_g = entity_embeds.reshape(rows_total, k * D)                        # free reshape

    out = pl.pallas_call(
        _pos_encoder_kernel,
        out_shape=jax.ShapeDtypeStruct((rows_total, k * D), entity_embeds.dtype),
        grid_spec=pltpu.PrefetchScalarGridSpec(
            num_scalar_prefetch=0,
            grid=(B // TB,),
            in_specs=[
                pl.BlockSpec((TB, S), lambda i: (i, 0)),                # ids
                pl.BlockSpec((rows_blk, k * D), lambda i: (i, 0)),      # entity embeds
                pl.BlockSpec((S, S), lambda i: (0, 0)),                 # triu (resident)
                pl.BlockSpec((rows_blk, TB), lambda i: (0, 0)),         # expand
                pl.BlockSpec((rows_blk, S), lambda i: (0, 0)),          # sel
                pl.BlockSpec((S, k * MLP), lambda i: (0, 0)),           # collapse
                pl.BlockSpec((1, k * MLP), lambda i: (0, 0)),           # mrow
                pl.BlockSpec((k * MLP, k * D), lambda i: (0, 0)),       # block-diag table
            ],
            out_specs=pl.BlockSpec((rows_blk, k * D), lambda i: (i, 0)),
        ),
        compiler_params=pltpu.CompilerParams(
            dimension_semantics=("parallel",),
            vmem_limit_bytes=32 * 1024 * 1024),
        # TODO(synk): optionally add input_output_aliases={1: 0} when the
        # caller donates entity_embeds (pure elementwise-add output).
    )(ids, ent_g, triu, expand, sel, collapse, mrow, wblk)
    return out.reshape(B, S, D)


def _reference(entity_embeds, entity_list, weight):
    mask = (entity_list != PAD_IDX).astype(jnp.int32)
    positions = jnp.cumsum(mask, axis=-1) * mask + PAD_IDX
    return entity_embeds + weight[positions]


if __name__ == "__main__":
    key = jax.random.PRNGKey(0)
    k1, k2, k3 = jax.random.split(key, 3)

    B, S, D = 2, 8, 32

    # Deterministic "xavier_uniform_" style init of pos_embedding.weight.
    # (As in the torch module, xavier init runs after padding_idx zeroing, so
    #  the pad row is NOT forced to zero.)
    a = (6.0 / (MAX_LEN + D)) ** 0.5
    weight = jax.random.uniform(k1, (MAX_LEN, D), jnp.float32, minval=-a, maxval=a)

    entity_embeds = jax.random.normal(k2, (B, S, D), jnp.float32)
    entity_list = jax.random.randint(k3, (B, S), 0, 5, dtype=jnp.int32)  # 0 == pad

    out = jax.block_until_ready(
        learned_positional_encoder(entity_embeds, entity_list, weight))

    ref = _reference(entity_embeds, entity_list, weight)
    assert out.shape == (B, S, D)
    assert jnp.allclose(out, ref, atol=1e-5, rtol=1e-5), "mismatch vs reference"

    print("KERNEL_OK")
</pallas_src>

<mosaic_0001>
module attributes {stable_mosaic.version = 11 : i64} {
  func.func @_pos_encoder_kernel(%arg0: i32, %arg1: memref<2x8xi32, #tpu.memory_space<vmem>>, %arg2: memref<4x128xf32, #tpu.memory_space<vmem>>, %arg3: memref<8x8xf32, #tpu.memory_space<vmem>>, %arg4: memref<4x2xf32, #tpu.memory_space<vmem>>, %arg5: memref<4x8xf32, #tpu.memory_space<vmem>>, %arg6: memref<8x128xf32, #tpu.memory_space<vmem>>, %arg7: memref<1x128xf32, #tpu.memory_space<vmem>>, %arg8: memref<128x128xf32, #tpu.memory_space<vmem>>, %arg9: memref<4x128xf32, #tpu.memory_space<vmem>>) attributes {dimension_semantics = [#tpu.dimension_semantics<parallel>], iteration_bounds = array<i64: 1>, scalar_prefetch = 0 : i64, scratch_operands = 0 : i64, tpu.core_type = #tpu.core_type<tc>, window_params = [{transform_indices = @transform_0, window_bounds = array<i64: 2, 8>}, {transform_indices = @transform_1, window_bounds = array<i64: 4, 128>}, {pipeline_mode = #tpu.pipeline_mode<synchronous>, transform_indices = @transform_2, window_bounds = array<i64: 8, 8>}, {pipeline_mode = #tpu.pipeline_mode<synchronous>, transform_indices = @transform_3, window_bounds = array<i64: 4, 2>}, {pipeline_mode = #tpu.pipeline_mode<synchronous>, transform_indices = @transform_4, window_bounds = array<i64: 4, 8>}, {pipeline_mode = #tpu.pipeline_mode<synchronous>, transform_indices = @transform_5, window_bounds = array<i64: 8, 128>}, {pipeline_mode = #tpu.pipeline_mode<synchronous>, transform_indices = @transform_6, window_bounds = array<i64: 1, 128>}, {pipeline_mode = #tpu.pipeline_mode<synchronous>, transform_indices = @transform_7, window_bounds = array<i64: 128, 128>}, {transform_indices = @transform_8, window_bounds = array<i64: 4, 128>}]} {
    %c0 = arith.constant 0 : index
    %c0_0 = arith.constant 0 : index
    %0 = vector.load %arg1[%c0, %c0_0] : memref<2x8xi32, #tpu.memory_space<vmem>>, vector<2x8xi32>
    %c0_i32 = arith.constant 0 : i32
    %1 = vector.broadcast %c0_i32 : i32 to vector<2x8xi32>
    %2 = arith.cmpi ne, %0, %1 : vector<2x8xi32>
    %3 = arith.extui %2 : vector<2x8xi1> to vector<2x8xi32>
    %4 = arith.sitofp %3 : vector<2x8xi32> to vector<2x8xf32>
    %c0_1 = arith.constant 0 : index
    %c0_2 = arith.constant 0 : index
    %5 = vector.load %arg3[%c0_1, %c0_2] : memref<8x8xf32, #tpu.memory_space<vmem>>, vector<8x8xf32>
    %cst = arith.constant dense<0.000000e+00> : vector<2x8xf32>
    %6 = tpu.matmul %4, %5, %cst {dimension_numbers = #tpu.dot_dimension_numbers<[1], [0], [0], [1], [0, 0, 1, 1], [], []>} : vector<2x8xf32>, vector<8x8xf32>, vector<2x8xf32> -> vector<2x8xf32>
    %7 = arith.mulf %6, %4 : vector<2x8xf32>
    %cst_3 = arith.constant 0.000000e+00 : f32
    %8 = vector.broadcast %cst_3 : f32 to vector<2x8xf32>
    %9 = arith.addf %7, %8 : vector<2x8xf32>
    %c0_4 = arith.constant 0 : index
    %c0_5 = arith.constant 0 : index
    %10 = vector.load %arg4[%c0_4, %c0_5] : memref<4x2xf32, #tpu.memory_space<vmem>>, vector<4x2xf32>
    %cst_6 = arith.constant dense<0.000000e+00> : vector<4x8xf32>
    %11 = tpu.matmul %10, %9, %cst_6 {dimension_numbers = #tpu.dot_dimension_numbers<[1], [0], [0], [1], [0, 0, 1, 1], [], []>} : vector<4x2xf32>, vector<2x8xf32>, vector<4x8xf32> -> vector<4x8xf32>
    %c0_7 = arith.constant 0 : index
    %c0_8 = arith.constant 0 : index
    %12 = vector.load %arg5[%c0_7, %c0_8] : memref<4x8xf32, #tpu.memory_space<vmem>>, vector<4x8xf32>
    %13 = arith.mulf %11, %12 : vector<4x8xf32>
    %c0_9 = arith.constant 0 : index
    %c0_10 = arith.constant 0 : index
    %14 = vector.load %arg6[%c0_9, %c0_10] : memref<8x128xf32, #tpu.memory_space<vmem>>, vector<8x128xf32>
    %cst_11 = arith.constant dense<0.000000e+00> : vector<4x128xf32>
    %15 = tpu.matmul %13, %14, %cst_11 {dimension_numbers = #tpu.dot_dimension_numbers<[1], [0], [0], [1], [0, 0, 1, 1], [], []>} : vector<4x8xf32>, vector<8x128xf32>, vector<4x128xf32> -> vector<4x128xf32>
    %c0_12 = arith.constant 0 : index
    %c0_13 = arith.constant 0 : index
    %16 = vector.load %arg7[%c0_12, %c0_13] : memref<1x128xf32, #tpu.memory_space<vmem>>, vector<1x128xf32>
    %17 = vector.broadcast %16 : vector<1x128xf32> to vector<4x128xf32>
    %18 = arith.cmpf oeq, %15, %17 : vector<4x128xf32>
    %19 = arith.extui %18 : vector<4x128xi1> to vector<4x128xi32>
    %20 = arith.sitofp %19 : vector<4x128xi32> to vector<4x128xf32>
    %c0_14 = arith.constant 0 : index
    %c0_15 = arith.constant 0 : index
    %21 = vector.load %arg8[%c0_14, %c0_15] : memref<128x128xf32, #tpu.memory_space<vmem>>, vector<128x128xf32>
    %cst_16 = arith.constant dense<0.000000e+00> : vector<4x128xf32>
    %22 = tpu.matmul %20, %21, %cst_16 {dimension_numbers = #tpu.dot_dimension_numbers<[1], [0], [0], [1], [0, 0, 1, 1], [], []>} : vector<4x128xf32>, vector<128x128xf32>, vector<4x128xf32> -> vector<4x128xf32>
    %c0_17 = arith.constant 0 : index
    %c0_18 = arith.constant 0 : index
    %23 = vector.load %arg2[%c0_17, %c0_18] : memref<4x128xf32, #tpu.memory_space<vmem>>, vector<4x128xf32>
    %24 = arith.addf %23, %22 : vector<4x128xf32>
    %c0_19 = arith.constant 0 : index
    %c0_20 = arith.constant 0 : index
    %25 = vector.load %arg9[%c0_19, %c0_20] : memref<4x128xf32, #tpu.memory_space<vmem>>, vector<4x128xf32>
    tpu.vector_store %arg9[%c0_19, %c0_20], %24 {strides = array<i32>} : memref<4x128xf32, #tpu.memory_space<vmem>>, vector<4x128xf32>,
    return
  }
  func.func @transform_0(%arg0: i32) -> (i32, i32) {
    %c0_i32 = arith.constant 0 : i32
    %c0_i32_0 = arith.constant 0 : i32
    return %arg0, %c0_i32 : i32, i32
  }
  func.func @transform_1(%arg0: i32) -> (i32, i32) {
    %c0_i32 = arith.constant 0 : i32
    %c0_i32_0 = arith.constant 0 : i32
    return %arg0, %c0_i32 : i32, i32
  }
  func.func @transform_2(%arg0: i32) -> (i32, i32) {
    %c0_i32 = arith.constant 0 : i32
    %c0_i32_0 = arith.constant 0 : i32
    %c0_i32_1 = arith.constant 0 : i32
    return %c0_i32, %c0_i32_0 : i32, i32
  }
  func.func @transform_3(%arg0: i32) -> (i32, i32) {
    %c0_i32 = arith.constant 0 : i32
    %c0_i32_0 = arith.constant 0 : i32
    %c0_i32_1 = arith.constant 0 : i32
    return %c0_i32, %c0_i32_0 : i32, i32
  }
  func.func @transform_4(%arg0: i32) -> (i32, i32) {
    %c0_i32 = arith.constant 0 : i32
    %c0_i32_0 = arith.constant 0 : i32
    %c0_i32_1 = arith.constant 0 : i32
    return %c0_i32, %c0_i32_0 : i32, i32
  }
  func.func @transform_5(%arg0: i32) -> (i32, i32) {
    %c0_i32 = arith.constant 0 : i32
    %c0_i32_0 = arith.constant 0 : i32
    %c0_i32_1 = arith.constant 0 : i32
    return %c0_i32, %c0_i32_0 : i32, i32
  }
  func.func @transform_6(%arg0: i32) -> (i32, i32) {
    %c0_i32 = arith.constant 0 : i32
    %c0_i32_0 = arith.constant 0 : i32
    %c0_i32_1 = arith.constant 0 : i32
    return %c0_i32, %c0_i32_0 : i32, i32
  }
  func.func @transform_7(%arg0: i32) -> (i32, i32) {
    %c0_i32 = arith.constant 0 : i32
    %c0_i32_0 = arith.constant 0 : i32
    %c0_i32_1 = arith.constant 0 : i32
    return %c0_i32, %c0_i32_0 : i32, i32
  }
  func.func @transform_8(%arg0: i32) -> (i32, i32) {
    %c0_i32 = arith.constant 0 : i32
    %c0_i32_0 = arith.constant 0 : i32
    return %arg0, %c0_i32 : i32, i32
  }
}

</mosaic_0001>

<llo_original>
// kernel: tpu_custom_call.1
$region0: #{tpu_custom_call.1}
  #allocation0 [shape = 'u32[]', space=smem, size = 0x4, offset = 0x4, fixed_abs, tag = 'smem constant byte address 0x4 - core index']
  #allocation1 [shape = 'u32[144,128]{1,0:T(1,128)}', space=vmem, size = 0x12000, scoped, tag = 'internal scratch']
  %s0 = inlined_call_operand.hbm [shape: s32[2,8], index: 0, kind: input, shape index: {}]
  %s1 = inlined_call_operand.hbm [shape: f32[4,128], index: 1, kind: input, shape index: {}]
  %s2 = inlined_call_operand.vmem [shape: f32[8,8], index: 2, kind: input, shape index: {}]
  %s3 = inlined_call_operand.vmem [shape: f32[4,2], index: 3, kind: input, shape index: {}]
  %s4 = inlined_call_operand.vmem [shape: f32[4,8], index: 4, kind: input, shape index: {}]
  %s5 = inlined_call_operand.hbm [shape: f32[8,128], index: 5, kind: input, shape index: {}]
  %s6 = inlined_call_operand.vmem [shape: f32[1,128], index: 6, kind: input, shape index: {}]
  %s7 = inlined_call_operand.hbm [shape: f32[128,128], index: 7, kind: input, shape index: {}]
  %s8 = inlined_call_operand.hbm [shape: f32[4,128], index: 8, kind: output, shape index: {}]
  %s9 = sld [smem:[#allocation0]]
  $region58: #{tpu_custom_call.1} parent=0
    _
  %s11 = ssub.s32 1, %s9
  %s12 = scalar_select 0, %s11, %s9
  $region1: #{tpu_custom_call.1} parent=0
    #allocation2 [shape = 'u8[1024]{0}', space=vmem, size = 0x400, scoped, tag = 'input window, operand 0, single buffered']
    #allocation3 [shape = 's32[1]{0}', space=sflag, size = 0x4, scoped, tag = 'scoped memory for tpu_custom_call.1']
    #allocation4 [shape = 's32[1]{0}', space=sflag, size = 0x4, scoped, tag = 'scoped memory for tpu_custom_call.1']
    #allocation5 [shape = 'u8[2048]{0}', space=vmem, size = 0x800, scoped, tag = 'input window, operand 1, single buffered']
    #allocation6 [shape = 's32[1]{0}', space=sflag, size = 0x4, scoped, tag = 'scoped memory for tpu_custom_call.1']
    #allocation7 [shape = 'u8[4096]{0}', space=vmem, size = 0x1000, scoped, tag = 'input window, operand 5, single buffered']
    #allocation8 [shape = 'u8[65536]{0}', space=vmem, size = 0x10000, scoped, tag = 'input window, operand 7, single buffered']
    #allocation9 [shape = 's32[1]{0}', space=sflag, size = 0x4, scoped, tag = 'scoped memory for tpu_custom_call.1']
    #allocation10 [shape = 'u8[2048]{0}', space=vmem, size = 0x800, scoped, tag = 'output window, operand 0, single buffered']
    %13 = vsyncpa [#allocation3], 0
    %14 = vsyncpa [#allocation6], 0
    %15 = vsyncpa [#allocation9], 0
    %16 = vsyncpa [#allocation4], 0
    // Predicated region
    $region2: #{tpu_custom_call.1} parent=1 // pred_check
      _
    $region3: #{tpu_custom_call.1} parent=1 // pred_check_branch
      %18 = sbr.rel (0) target = $region5
    $region4: #{tpu_custom_call.1} parent=1 // pred_region
      %s20 = ssub.s32 32, 32
      %21 = vsyncadd [#allocation3], %s20
      %s23 = sshll.u32 [#allocation2], 4
      %s24 = int_to_ptr.vmem [resolvable:$true] %s23
      %26 = dma.hbm_to_vmem [thread:$0]  %s0, 32, %s24, [#allocation3]
    $region5: #{tpu_custom_call.1} parent=1 // pred_fallthru
      _
    // Predicated region
    $region6: #{tpu_custom_call.1} parent=1 // pred_check
      _
    $region7: #{tpu_custom_call.1} parent=1 // pred_check_branch
      %28 = sbr.rel (0) target = $region9
    $region8: #{tpu_custom_call.1} parent=1 // pred_region
      %s30 = ssub.s32 64, 64
      %31 = vsyncadd [#allocation6], %s30
      %s33 = sshll.u32 [#allocation5], 4
      %s34 = int_to_ptr.vmem [resolvable:$true] %s33
      %36 = dma.hbm_to_vmem [thread:$0]  %s1, 64, %s34, [#allocation6]
    $region9: #{tpu_custom_call.1} parent=1 // pred_fallthru
      _
    // Predicated region
    $region10: #{tpu_custom_call.1} parent=1 // pred_check
      _
    $region11: #{tpu_custom_call.1} parent=1 // pred_check_branch
      %38 = sbr.rel (0) target = $region13
    $region12: #{tpu_custom_call.1} parent=1 // pred_region
      _
    $region13: #{tpu_custom_call.1} parent=1 // pred_fallthru
      _
    // Predicated region
    $region14: #{tpu_custom_call.1} parent=1 // pred_check
      _
    $region15: #{tpu_custom_call.1} parent=1 // pred_check_branch
      %40 = sbr.rel (0) target = $region17
    $region16: #{tpu_custom_call.1} parent=1 // pred_region
      _
    $region17: #{tpu_custom_call.1} parent=1 // pred_fallthru
      _
    // Predicated region
    $region18: #{tpu_custom_call.1} parent=1 // pred_check
      _
    $region19: #{tpu_custom_call.1} parent=1 // pred_check_branch
      %42 = sbr.rel (0) target = $region21
    $region20: #{tpu_custom_call.1} parent=1 // pred_region
      _
    $region21: #{tpu_custom_call.1} parent=1 // pred_fallthru
      _
    // Predicated region
    $region22: #{tpu_custom_call.1} parent=1 // pred_check
      _
    $region23: #{tpu_custom_call.1} parent=1 // pred_check_branch
      %44 = sbr.rel (0) target = $region25
    $region24: #{tpu_custom_call.1} parent=1 // pred_region
      %s46 = ssub.s32 128, 128
      %47 = vsyncadd [#allocation6], %s46
      %s49 = sshll.u32 [#allocation7], 4
      %s50 = int_to_ptr.vmem [resolvable:$true] %s49
      %52 = dma.hbm_to_vmem [thread:$0]  %s5, 128, %s50, [#allocation6]
    $region25: #{tpu_custom_call.1} parent=1 // pred_fallthru
      _
    // Predicated region
    $region26: #{tpu_custom_call.1} parent=1 // pred_check
      _
    $region27: #{tpu_custom_call.1} parent=1 // pred_check_branch
      %54 = sbr.rel (0) target = $region29
    $region28: #{tpu_custom_call.1} parent=1 // pred_region
      _
    $region29: #{tpu_custom_call.1} parent=1 // pred_fallthru
      _
    // Predicated region
    $region30: #{tpu_custom_call.1} parent=1 // pred_check
      _
    $region31: #{tpu_custom_call.1} parent=1 // pred_check_branch
      %56 = sbr.rel (0) target = $region33
    $region32: #{tpu_custom_call.1} parent=1 // pred_region
      %s58 = ssub.s32 2048, 2048
      %59 = vsyncadd [#allocation9], %s58
      %s60 = sshll.u32 [#allocation8], 4
      %s61 = int_to_ptr.vmem [resolvable:$true] %s60
      %66 = dma.hbm_to_vmem [thread:$0]  %s7, 2048, %s61, [#allocation9], 128, 128, 8
    $region33: #{tpu_custom_call.1} parent=1 // pred_fallthru
      _
    // Predicated region
    $region34: #{tpu_custom_call.1} parent=1 // pred_check
      _
    $region35: #{tpu_custom_call.1} parent=1 // pred_check_branch
      %68 = sbr.rel (0) target = $region37
    $region36: #{tpu_custom_call.1} parent=1 // pred_region
      %69 = dma.done [#allocation3], 32
    $region37: #{tpu_custom_call.1} parent=1 // pred_fallthru
      _
    // Predicated region
    $region38: #{tpu_custom_call.1} parent=1 // pred_check
      _
    $region39: #{tpu_custom_call.1} parent=1 // pred_check_branch
      %71 = sbr.rel (0) target = $region41
    $region40: #{tpu_custom_call.1} parent=1 // pred_region
      %72 = dma.done [#allocation6], 64
    $region41: #{tpu_custom_call.1} parent=1 // pred_fallthru
      _
    // Predicated region
    $region42: #{tpu_custom_call.1} parent=1 // pred_check
      _
    $region43: #{tpu_custom_call.1} parent=1 // pred_check_branch
      %74 = sbr.rel (0) target = $region45
    $region44: #{tpu_custom_call.1} parent=1 // pred_region
      %75 = dma.done [#allocation6], 128
    $region45: #{tpu_custom_call.1} parent=1 // pred_fallthru
      _
    // Predicated region
    $region46: #{tpu_custom_call.1} parent=1 // pred_check
      _
    $region47: #{tpu_custom_call.1} parent=1 // pred_check_branch
      %77 = sbr.rel (0) target = $region49
    $region48: #{tpu_custom_call.1} parent=1 // pred_region
      %78 = dma.done [#allocation9], 2048
    $region49: #{tpu_custom_call.1} parent=1 // pred_fallthru
      _
    %v79 = vld [vmem:[#allocation2] sm:$0x3]
    %vm80 = vcmp.ne.s32.totalorder %v79, 0
    %v81 = vsel %vm80, 1, 0
    %v82 = vcvt.s32.f32 %v81
    %v83 = vld [vmem:[%s2] sm:$0xff]
    %vm84 = vcmask 64512
    %v86 = vsel %vm84, %v82, 0
    %88 = vmatprep.subr.mxu0 0.0
    %89 = vmatpush1.msra.mxu0 0.0
    %90 = vmatprep.subr.mxu0 0.0
    %91 = vmatpush1.msra.mxu0 0.0
    %92 = vmatprep.subr.mxu0 0.0
    %93 = vmatpush1.msra.mxu0 0.0
    %94 = vmatprep.subr.mxu0 0.0
    %95 = vmatpush1.msra.mxu0 0.0
    %96 = vmatprep.subr.mxu0 0.0
    %97 = vmatpush1.msra.mxu0 0.0
    %98 = vmatprep.subr.mxu0 0.0
    %99 = vmatpush1.msra.mxu0 0.0
    %100 = vmatprep.subr.mxu0 0.0
    %101 = vmatpush1.msra.mxu0 0.0
    %102 = vmatprep.subr.mxu0 0.0
    %103 = vmatpush1.msra.mxu0 0.0
    %104 = vmatprep.subr.mxu0 0.0
    %105 = vmatpush1.msra.mxu0 0.0
    %106 = vmatprep.subr.mxu0 0.0
    %107 = vmatpush1.msra.mxu0 0.0
    %108 = vmatprep.subr.mxu0 0.0
    %109 = vmatpush1.msra.mxu0 0.0
    %110 = vmatprep.subr.mxu0 0.0
    %111 = vmatpush1.msra.mxu0 0.0
    %112 = vmatprep.subr.mxu0 0.0
    %113 = vmatpush1.msra.mxu0 0.0
    %114 = vmatprep.subr.mxu0 0.0
    %115 = vmatpush1.msra.mxu0 0.0
    %116 = vmatprep.subr.mxu0 0.0
    %117 = vmatpush1.msra.mxu0 0.0
    %118 = vmatprep.subr.mxu0 0.0
    %119 = vmatpush1.msra.mxu0 %v83
    %120 = vmatprep.subr.mxu0 0.0
    %121 = vmatpush2.msra.mxu0 0.0
    %122 = vmatprep.subr.mxu0 0.0
    %123 = vmatpush2.msra.mxu0 0.0
    %124 = vmatprep.subr.mxu0 0.0
    %125 = vmatpush2.msra.mxu0 0.0
    %126 = vmatprep.subr.mxu0 0.0
    %127 = vmatpush2.msra.mxu0 0.0
    %128 = vmatprep.subr.mxu0 0.0
    %129 = vmatpush2.msra.mxu0 0.0
    %130 = vmatprep.subr.mxu0 0.0
    %131 = vmatpush2.msra.mxu0 0.0
    %132 = vmatprep.subr.mxu0 0.0
    %133 = vmatpush2.msra.mxu0 0.0
    %134 = vmatprep.subr.mxu0 0.0
    %135 = vmatpush2.msra.mxu0 0.0
    %136 = vmatprep.subr.mxu0 0.0
    %137 = vmatpush2.msra.mxu0 0.0
    %138 = vmatprep.subr.mxu0 0.0
    %139 = vmatpush2.msra.mxu0 0.0
    %140 = vmatprep.subr.mxu0 0.0
    %141 = vmatpush2.msra.mxu0 0.0
    %142 = vmatprep.subr.mxu0 0.0
    %143 = vmatpush2.msra.mxu0 0.0
    %144 = vmatprep.subr.mxu0 0.0
    %145 = vmatpush2.msra.mxu0 0.0
    %146 = vmatprep.subr.mxu0 0.0
    %147 = vmatpush2.msra.mxu0 0.0
    %148 = vmatprep.subr.mxu0 0.0
    %149 = vmatpush2.msra.mxu0 0.0
    %150 = vmatprep.subr.mxu0 0.0
    %151 = vmatpush2.msra.mxu0 0.0
    %152 = vmatprep.mubr.f32.mxu0 0.0
    %153 = vmatmul.mubr.f32.gmra.mxu0 %v86
    %v154 = vpop.f32.mrf.mxu0
    %v155 = vadd.f32 0.0, %v154
    %v156 = vpop.f32.mrf.mxu0
    %157 = vdwg.mxu0
    %v158 = vmul.f32 %v155, %v82
    %v159 = vadd.f32 %v158, 0.0
    %v160 = vld [vmem:[%s3] sm:$0xf]
    %vm161 = vcmask 15360
    %v163 = vsel %vm161, %v160, 0
    %vm165 = vcmask 1041408
    %v167 = vsel %vm165, %v159, 0
    %169 = vmatprep.subr.mxu0 0.0
    %170 = vmatpush1.msra.mxu0 0.0
    %171 = vmatprep.subr.mxu0 0.0
    %172 = vmatpush1.msra.mxu0 0.0
    %173 = vmatprep.subr.mxu0 0.0
    %174 = vmatpush1.msra.mxu0 0.0
    %175 = vmatprep.subr.mxu0 0.0
    %176 = vmatpush1.msra.mxu0 0.0
    %177 = vmatprep.subr.mxu0 0.0
    %178 = vmatpush1.msra.mxu0 0.0
    %179 = vmatprep.subr.mxu0 0.0
    %180 = vmatpush1.msra.mxu0 0.0
    %181 = vmatprep.subr.mxu0 0.0
    %182 = vmatpush1.msra.mxu0 0.0
    %183 = vmatprep.subr.mxu0 0.0
    %184 = vmatpush1.msra.mxu0 0.0
    %185 = vmatprep.subr.mxu0 0.0
    %186 = vmatpush1.msra.mxu0 0.0
    %187 = vmatprep.subr.mxu0 0.0
    %188 = vmatpush1.msra.mxu0 0.0
    %189 = vmatprep.subr.mxu0 0.0
    %190 = vmatpush1.msra.mxu0 0.0
    %191 = vmatprep.subr.mxu0 0.0
    %192 = vmatpush1.msra.mxu0 0.0
    %193 = vmatprep.subr.mxu0 0.0
    %194 = vmatpush1.msra.mxu0 0.0
    %195 = vmatprep.subr.mxu0 0.0
    %196 = vmatpush1.msra.mxu0 0.0
    %197 = vmatprep.subr.mxu0 0.0
    %198 = vmatpush1.msra.mxu0 0.0
    %199 = vmatprep.subr.mxu0 0.0
    %200 = vmatpush1.msra.mxu0 %v167
    %201 = vmatprep.subr.mxu0 0.0
    %202 = vmatpush2.msra.mxu0 0.0
    %203 = vmatprep.subr.mxu0 0.0
    %204 = vmatpush2.msra.mxu0 0.0
    %205 = vmatprep.subr.mxu0 0.0
    %206 = vmatpush2.msra.mxu0 0.0
    %207 = vmatprep.subr.mxu0 0.0
    %208 = vmatpush2.msra.mxu0 0.0
    %209 = vmatprep.subr.mxu0 0.0
    %210 = vmatpush2.msra.mxu0 0.0
    %211 = vmatprep.subr.mxu0 0.0
    %212 = vmatpush2.msra.mxu0 0.0
    %213 = vmatprep.subr.mxu0 0.0
    %214 = vmatpush2.msra.mxu0 0.0
    %215 = vmatprep.subr.mxu0 0.0
    %216 = vmatpush2.msra.mxu0 0.0
    %217 = vmatprep.subr.mxu0 0.0
    %218 = vmatpush2.msra.mxu0 0.0
    %219 = vmatprep.subr.mxu0 0.0
    %220 = vmatpush2.msra.mxu0 0.0
    %221 = vmatprep.subr.mxu0 0.0
    %222 = vmatpush2.msra.mxu0 0.0
    %223 = vmatprep.subr.mxu0 0.0
    %224 = vmatpush2.msra.mxu0 0.0
    %225 = vmatprep.subr.mxu0 0.0
    %226 = vmatpush2.msra.mxu0 0.0
    %227 = vmatprep.subr.mxu0 0.0
    %228 = vmatpush2.msra.mxu0 0.0
    %229 = vmatprep.subr.mxu0 0.0
    %230 = vmatpush2.msra.mxu0 0.0
    %231 = vmatprep.subr.mxu0 0.0
    %232 = vmatpush2.msra.mxu0 0.0
    %233 = vmatprep.mubr.f32.mxu0 0.0
    %234 = vmatmul.mubr.f32.gmra.mxu0 %v163
    %v235 = vpop.f32.mrf.mxu0
    %v236 = vadd.f32 0.0, %v235
    %v237 = vpop.f32.mrf.mxu0
    %238 = vdwg.mxu0
    %v239 = vld [vmem:[%s4] sm:$0xf]
    %v240 = vmul.f32 %v236, %v239
    %v241 = vld [vmem:[#allocation7] sm:$0xff]
    %v243 = vsel %vm84, %v240, 0
    %245 = vmatprep.subr.mxu0 0.0
    %246 = vmatpush1.msra.mxu0 0.0
    %247 = vmatprep.subr.mxu0 0.0
    %248 = vmatpush1.msra.mxu0 0.0
    %249 = vmatprep.subr.mxu0 0.0
    %250 = vmatpush1.msra.mxu0 0.0
    %251 = vmatprep.subr.mxu0 0.0
    %252 = vmatpush1.msra.mxu0 0.0
    %253 = vmatprep.subr.mxu0 0.0
    %254 = vmatpush1.msra.mxu0 0.0
    %255 = vmatprep.subr.mxu0 0.0
    %256 = vmatpush1.msra.mxu0 0.0
    %257 = vmatprep.subr.mxu0 0.0
    %258 = vmatpush1.msra.mxu0 0.0
    %259 = vmatprep.subr.mxu0 0.0
    %260 = vmatpush1.msra.mxu0 0.0
    %261 = vmatprep.subr.mxu0 0.0
    %262 = vmatpush1.msra.mxu0 0.0
    %263 = vmatprep.subr.mxu0 0.0
    %264 = vmatpush1.msra.mxu0 0.0
    %265 = vmatprep.subr.mxu0 0.0
    %266 = vmatpush1.msra.mxu0 0.0
    %267 = vmatprep.subr.mxu0 0.0
    %268 = vmatpush1.msra.mxu0 0.0
    %269 = vmatprep.subr.mxu0 0.0
    %270 = vmatpush1.msra.mxu0 0.0
    %271 = vmatprep.subr.mxu0 0.0
    %272 = vmatpush1.msra.mxu0 0.0
    %273 = vmatprep.subr.mxu0 0.0
    %274 = vmatpush1.msra.mxu0 0.0
    %275 = vmatprep.subr.mxu0 0.0
    %276 = vmatpush1.msra.mxu0 %v241
    %277 = vmatprep.subr.mxu0 0.0
    %278 = vmatpush2.msra.mxu0 0.0
    %279 = vmatprep.subr.mxu0 0.0
    %280 = vmatpush2.msra.mxu0 0.0
    %281 = vmatprep.subr.mxu0 0.0
    %282 = vmatpush2.msra.mxu0 0.0
    %283 = vmatprep.subr.mxu0 0.0
    %284 = vmatpush2.msra.mxu0 0.0
    %285 = vmatprep.subr.mxu0 0.0
    %286 = vmatpush2.msra.mxu0 0.0
    %287 = vmatprep.subr.mxu0 0.0
    %288 = vmatpush2.msra.mxu0 0.0
    %289 = vmatprep.subr.mxu0 0.0
    %290 = vmatpush2.msra.mxu0 0.0
    %291 = vmatprep.subr.mxu0 0.0
    %292 = vmatpush2.msra.mxu0 0.0
    %293 = vmatprep.subr.mxu0 0.0
    %294 = vmatpush2.msra.mxu0 0.0
    %295 = vmatprep.subr.mxu0 0.0
    %296 = vmatpush2.msra.mxu0 0.0
    %297 = vmatprep.subr.mxu0 0.0
    %298 = vmatpush2.msra.mxu0 0.0
    %299 = vmatprep.subr.mxu0 0.0
    %300 = vmatpush2.msra.mxu0 0.0
    %301 = vmatprep.subr.mxu0 0.0
    %302 = vmatpush2.msra.mxu0 0.0
    %303 = vmatprep.subr.mxu0 0.0
    %304 = vmatpush2.msra.mxu0 0.0
    %305 = vmatprep.subr.mxu0 0.0
    %306 = vmatpush2.msra.mxu0 0.0
    %307 = vmatprep.subr.mxu0 0.0
    %308 = vmatpush2.msra.mxu0 0.0
    %309 = vmatprep.mubr.f32.mxu0 0.0
    %310 = vmatmul.mubr.f32.gmra.mxu0 %v243
    %v311 = vpop.f32.mrf.mxu0
    %v312 = vadd.f32 0.0, %v311
    %v313 = vpop.f32.mrf.mxu0
    %314 = vdwg.mxu0
    %v315 = vld [vmem:[%s6] sm:$0x1]
    %v317 = vlaneseq
    %v318 = vshrl.u32 %v317, 7
    %v319 = vsub.s32 0, %v318
    %v320 = vrot.slane %v315, %v319
    %vm322 = vcmp.eq.f32.partialorder %v312, %v320
    %v323 = vsel %vm322, 1, 0
    %v324 = vcvt.s32.f32 %v323
    %v325 = vld [vmem:[#allocation8] sm:$0xff]
    %v326 = vld [vmem:[#allocation8 + $0x8] sm:$0xff]
    %v327 = vld [vmem:[#allocation8 + $0x10] sm:$0xff]
    %v328 = vld [vmem:[#allocation8 + $0x18] sm:$0xff]
    %v329 = vld [vmem:[#allocation8 + $0x20] sm:$0xff]
    %v330 = vld [vmem:[#allocation8 + $0x28] sm:$0xff]
    %v331 = vld [vmem:[#allocation8 + $0x30] sm:$0xff]
    %v332 = vld [vmem:[#allocation8 + $0x38] sm:$0xff]
    %v333 = vld [vmem:[#allocation8 + $0x40] sm:$0xff]
    %v334 = vld [vmem:[#allocation8 + $0x48] sm:$0xff]
    %v335 = vld [vmem:[#allocation8 + $0x50] sm:$0xff]
    %v336 = vld [vmem:[#allocation8 + $0x58] sm:$0xff]
    %v337 = vld [vmem:[#allocation8 + $0x60] sm:$0xff]
    %v338 = vld [vmem:[#allocation8 + $0x68] sm:$0xff]
    %v339 = vld [vmem:[#allocation8 + $0x70] sm:$0xff]
    %v340 = vld [vmem:[#allocation8 + $0x78] sm:$0xff]
    %341 = vmatprep.subr.mxu0 0.0
    %342 = vmatpush1.msra.mxu0 %v340
    %343 = vmatprep.subr.mxu0 0.0
    %344 = vmatpush1.msra.mxu0 %v339
    %345 = vmatprep.subr.mxu0 0.0
    %346 = vmatpush1.msra.mxu0 %v338
    %347 = vmatprep.subr.mxu0 0.0
    %348 = vmatpush1.msra.mxu0 %v337
    %349 = vmatprep.subr.mxu0 0.0
    %350 = vmatpush1.msra.mxu0 %v336
    %351 = vmatprep.subr.mxu0 0.0
    %352 = vmatpush1.msra.mxu0 %v335
    %353 = vmatprep.subr.mxu0 0.0
    %354 = vmatpush1.msra.mxu0 %v334
    %355 = vmatprep.subr.mxu0 0.0
    %356 = vmatpush1.msra.mxu0 %v333
    %357 = vmatprep.subr.mxu0 0.0
    %358 = vmatpush1.msra.mxu0 %v332
    %359 = vmatprep.subr.mxu0 0.0
    %360 = vmatpush1.msra.mxu0 %v331
    %361 = vmatprep.subr.mxu0 0.0
    %362 = vmatpush1.msra.mxu0 %v330
    %363 = vmatprep.subr.mxu0 0.0
    %364 = vmatpush1.msra.mxu0 %v329
    %365 = vmatprep.subr.mxu0 0.0
    %366 = vmatpush1.msra.mxu0 %v328
    %367 = vmatprep.subr.mxu0 0.0
    %368 = vmatpush1.msra.mxu0 %v327
    %369 = vmatprep.subr.mxu0 0.0
    %370 = vmatpush1.msra.mxu0 %v326
    %371 = vmatprep.subr.mxu0 0.0
    %372 = vmatpush1.msra.mxu0 %v325
    %373 = vmatprep.subr.mxu0 0.0
    %374 = vmatpush2.msra.mxu0 0.0
    %375 = vmatprep.subr.mxu0 0.0
    %376 = vmatpush2.msra.mxu0 0.0
    %377 = vmatprep.subr.mxu0 0.0
    %378 = vmatpush2.msra.mxu0 0.0
    %379 = vmatprep.subr.mxu0 0.0
    %380 = vmatpush2.msra.mxu0 0.0
    %381 = vmatprep.subr.mxu0 0.0
    %382 = vmatpush2.msra.mxu0 0.0
    %383 = vmatprep.subr.mxu0 0.0
    %384 = vmatpush2.msra.mxu0 0.0
    %385 = vmatprep.subr.mxu0 0.0
    %386 = vmatpush2.msra.mxu0 0.0
    %387 = vmatprep.subr.mxu0 0.0
    %388 = vmatpush2.msra.mxu0 0.0
    %389 = vmatprep.subr.mxu0 0.0
    %390 = vmatpush2.msra.mxu0 0.0
    %391 = vmatprep.subr.mxu0 0.0
    %392 = vmatpush2.msra.mxu0 0.0
    %393 = vmatprep.subr.mxu0 0.0
    %394 = vmatpush2.msra.mxu0 0.0
    %395 = vmatprep.subr.mxu0 0.0
    %396 = vmatpush2.msra.mxu0 0.0
    %397 = vmatprep.subr.mxu0 0.0
    %398 = vmatpush2.msra.mxu0 0.0
    %399 = vmatprep.subr.mxu0 0.0
    %400 = vmatpush2.msra.mxu0 0.0
    %401 = vmatprep.subr.mxu0 0.0
    %402 = vmatpush2.msra.mxu0 0.0
    %403 = vmatprep.subr.mxu0 0.0
    %404 = vmatpush2.msra.mxu0 0.0
    %405 = vmatprep.mubr.f32.mxu0 0.0
    %406 = vmatmul.mubr.f32.gmra.mxu0 %v324
    %v407 = vpop.f32.mrf.mxu0
    %v408 = vadd.f32 0.0, %v407
    %v409 = vpop.f32.mrf.mxu0
    %410 = vdwg.mxu0
    %v411 = vld [vmem:[#allocation5] sm:$0xf]
    %v412 = vadd.f32 %v411, %v408
    %413 = vst [vmem:[#allocation10] sm:$0xf] %v412
    // Predicated region
    $region50: #{tpu_custom_call.1} parent=1 // pred_check
      _
    $region51: #{tpu_custom_call.1} parent=1 // pred_check_branch
      %415 = sbr.rel (0) target = $region53
    $region52: #{tpu_custom_call.1} parent=1 // pred_region
      %s417 = ssub.s32 64, 64
      %418 = vsyncadd [#allocation4], %s417
      %s420 = sshll.u32 [#allocation10], 4
      %s421 = int_to_ptr.vmem [resolvable:$true] %s420
      %423 = dma.vmem_to_hbm [thread:$0]  %s421, 64, %s8, [#allocation4]
    $region53: #{tpu_custom_call.1} parent=1 // pred_fallthru
      _
    // Predicated region
    $region54: #{tpu_custom_call.1} parent=1 // pred_check
      _
    $region55: #{tpu_custom_call.1} parent=1 // pred_check_branch
      %425 = sbr.rel (0) target = $region57
    $region56: #{tpu_custom_call.1} parent=1 // pred_region
      %426 = dma.done [#allocation4], 64
    $region57: #{tpu_custom_call.1} parent=1 // pred_fallthru
      _
    %427 = vsyncpa [#allocation3], 1
    %428 = vsyncpa [#allocation6], 1
    %429 = vsyncpa [#allocation9], 1
    %430 = vsyncpa [#allocation4], 1

</llo_original>
